<compile_context>
chip_gen: v7x
topology: tpu7x:2x2x1
jax: 0.10.0
libtpu: 0.0.40
codegen_flags: <defaults>
</compile_context>

<pallas_src>
import functools

import jax
import jax.numpy as jnp
from jax.experimental import pallas as pl
from jax.experimental.pallas import tpu as pltpu


def _iou_loss_kernel(*refs, loc_loss_type, has_weight, n):
    # refs: slab_ref (8, rb, 128) [, w_ref (rb, 128)], out_ref (1,1) SMEM,
    #       acc_ref (3,) SMEM scratch (persists across grid steps).
    if has_weight:
        slab_ref, w_ref, out_ref, acc_ref = refs
    else:
        slab_ref, out_ref, acc_ref = refs
        w_ref = None

    step = pl.program_id(0)

    @pl.when(step == 0)
    def _():
        acc_ref[0] = 0.0     # sum(losses)
        acc_ref[1] = 0.0     # sum(losses * weight)
        acc_ref[2] = 0.0     # sum(weight)

    # Per-plane ref reads: each is a (rb, 128) f32 tile, streamed from VMEM.
    p_l = slab_ref[0]
    p_t = slab_ref[1]
    p_r = slab_ref[2]
    p_b = slab_ref[3]
    t_l = slab_ref[4]
    t_t = slab_ref[5]
    t_r = slab_ref[6]
    t_b = slab_ref[7]

    pred_area = (p_r - p_l) * (p_b - p_t)
    tgt_area = (t_r - t_l) * (t_b - t_t)

    w_int = jnp.maximum(jnp.minimum(p_r, t_r) - jnp.maximum(p_l, t_l), 0.0)
    h_int = jnp.maximum(jnp.minimum(p_b, t_b) - jnp.maximum(p_t, t_t), 0.0)
    area_int = w_int * h_int
    area_uni = tgt_area + pred_area - area_int

    if loc_loss_type == 'iou':
        # -log((ai+1)/(au+1)) == log(au+1) - log(ai+1): two EUP logs, no divide.
        # Padded lanes: ai = au = 0 -> log(1) - log(1) = 0 exactly.
        losses = jnp.log(area_uni + 1.0) - jnp.log(area_int + 1.0)
    elif loc_loss_type == 'linear_iou':
        # 1 - (ai+1)/(au+1) == (au - ai)/(au + 1).  EUP approx reciprocal plus
        # one VPU Newton step (~1e-7 rel err); padded lanes give exactly 0
        # because (au - ai) == 0 there.
        den = area_uni + 1.0
        r0 = pl.reciprocal(den, approx=True)
        r1 = r0 * (2.0 - den * r0)
        losses = (area_uni - area_int) * r1
    else:
        raise NotImplementedError(loc_loss_type)

    acc_ref[0] += jnp.sum(losses)
    if has_weight:
        wv = w_ref[...]                       # zero in padded lanes
        acc_ref[1] += jnp.sum(losses * wv)
        acc_ref[2] += jnp.sum(wv)

    @pl.when(step == pl.num_programs(0) - 1)
    def _():
        n_f = jnp.float32(n)
        ls = acc_ref[0]
        if has_weight:
            wl = acc_ref[1]
            ws = acc_ref[2]
            num = jnp.where(ws > 0.0, wl, ls)
            den_s = jnp.where(ws > 0.0, ws, n_f)
            out_ref[0, 0] = num / den_s
        else:
            out_ref[0, 0] = ls / n_f


def iou_loss1(pred, target, weight=None, loc_loss_type='linear_iou'):
    """Pallas implementation of IOULoss1.forward. pred/target: (N, 4)."""
    assert pred.ndim == 2 and pred.shape[1] == 4
    assert pred.shape == target.shape
    n = pred.shape[0]
    assert n > 0

    lanes, sub = 128, 8
    # Block sizing: 8 * 256 * 128 f32 = 1 MiB slab block (+128 KiB weight);
    # double-buffered it stays far below the scoped-VMEM default on v5e/v6e and
    # the smaller 64 MiB VMEM of v7x.
    max_rows_per_block = 256

    r_min = -(-n // lanes)                 # rows needed to hold N lanes
    r_min = -(-r_min // sub) * sub         # sublane-dense (multiple of 8)
    if r_min <= max_rows_per_block:
        rows_per_block = r_min
        r = r_min
    else:
        rows_per_block = max_rows_per_block
        r = -(-r_min // rows_per_block) * rows_per_block
    grid_r = r // rows_per_block
    n_pad = r * lanes
    pad = n_pad - n

    # One concat along axis=1, one pad, ONE transpose -> (8, R, 128) slab.
    boxes = jnp.concatenate(
        [pred.astype(jnp.float32), target.astype(jnp.float32)], axis=1)   # (N, 8)
    boxes = jnp.pad(boxes, ((0, pad), (0, 0)))                            # (Np, 8)
    slab = boxes.T.reshape(8, r, lanes)                                   # (8,R,128)
    # rows 0..3 = pred l,t,r,b ; rows 4..7 = target l,t,r,b

    has_weight = weight is not None
    in_specs = [pl.BlockSpec((8, rows_per_block, lanes), lambda i: (0, i, 0))]
    args = [slab]
    if has_weight:
        w = jnp.pad(weight.astype(jnp.float32), (0, pad)).reshape(r, lanes)
        in_specs.append(pl.BlockSpec((rows_per_block, lanes), lambda i: (i, 0)))
        args.append(w)

    kernel = functools.partial(
        _iou_loss_kernel, loc_loss_type=loc_loss_type,
        has_weight=has_weight, n=n)

    out = pl.pallas_call(
        kernel,
        grid=(grid_r,),
        out_shape=jax.ShapeDtypeStruct((1, 1), jnp.float32),
        in_specs=in_specs,
        out_specs=pl.BlockSpec((1, 1), lambda i: (0, 0),
                               memory_space=pltpu.MemorySpace.SMEM),
        scratch_shapes=[pltpu.SMEM((3,), jnp.float32)],
        compiler_params=pltpu.CompilerParams(
            dimension_semantics=("arbitrary",)),
    )(*args)
    return out[0, 0]


def _reference(pred, target, weight, loc_loss_type):
    # pure-JAX reference mirroring the PyTorch forward
    pl_, pt, pr, pb = pred[:, 0], pred[:, 1], pred[:, 2], pred[:, 3]
    tl, tt, tr, tb = target[:, 0], target[:, 1], target[:, 2], target[:, 3]
    pred_area = (pr - pl_) * (pb - pt)
    tgt_area = (tr - tl) * (tb - tt)
    wi = jnp.maximum(jnp.minimum(pr, tr) - jnp.maximum(pl_, tl), 0.0)
    hi = jnp.maximum(jnp.minimum(pb, tb) - jnp.maximum(pt, tt), 0.0)
    ai = wi * hi
    au = tgt_area + pred_area - ai
    ious = (ai + 1.0) / (au + 1.0)
    losses = -jnp.log(ious) if loc_loss_type == 'iou' else 1.0 - ious
    if weight is not None and float(weight.sum()) > 0:
        return (losses * weight).sum() / weight.sum()
    return losses.mean()


def _make_boxes(key, n):
    k1, k2, k3, k4, k5 = jax.random.split(key, 5)
    # Well-formed ltrb boxes: left/top in [0, 4), right/bottom = left/top + size.
    p_lt = jax.random.uniform(k1, (n, 2), jnp.float32, 0.0, 4.0)
    p_sz = jax.random.uniform(k2, (n, 2), jnp.float32, 1.0, 5.0)
    t_lt = jax.random.uniform(k3, (n, 2), jnp.float32, 0.0, 4.0)
    t_sz = jax.random.uniform(k4, (n, 2), jnp.float32, 1.0, 5.0)
    pred = jnp.concatenate([p_lt, p_lt + p_sz], axis=1)      # (n, 4) l,t,r,b
    target = jnp.concatenate([t_lt, t_lt + t_sz], axis=1)    # (n, 4) l,t,r,b
    weight = jax.random.uniform(k5, (n,), jnp.float32, 0.0, 1.0)
    return pred, target, weight


if __name__ == "__main__":
    key = jax.random.PRNGKey(0)
    key_small, key_big = jax.random.split(key, 2)

    # Small shape, as seen by select_iou_loss1 (few positive box samples).
    N_SMALL = 24
    pred_s, target_s, weight_s = _make_boxes(key_small, N_SMALL)
    zero_weight_s = jnp.zeros((N_SMALL,), jnp.float32)       # fallback branch

    for loc_loss_type in ('linear_iou', 'iou'):
        for w in (weight_s, zero_weight_s, None):
            out = iou_loss1(pred_s, target_s, w, loc_loss_type)
            out = jax.block_until_ready(out)
            ref = _reference(pred_s, target_s, w, loc_loss_type)
            assert jnp.allclose(out, ref, rtol=1e-5, atol=1e-5), \
                ("small", loc_loss_type, w is None, out, ref)

    # Larger N exercises the 1-D reduction grid (grid_r > 1) / accumulator path.
    N_BIG = 40000
    pred_b, target_b, weight_b = _make_boxes(key_big, N_BIG)
    for loc_loss_type in ('linear_iou', 'iou'):
        for w in (weight_b, None):
            out = iou_loss1(pred_b, target_b, w, loc_loss_type)
            out = jax.block_until_ready(out)
            ref = _reference(pred_b, target_b, w, loc_loss_type)
            assert jnp.allclose(out, ref, rtol=1e-5, atol=1e-5), \
                ("big", loc_loss_type, w is None, out, ref)

    print("KERNEL_OK")
</pallas_src>

<mosaic_0001>
module attributes {stable_mosaic.version = 11 : i64} {
  func.func @_iou_loss_kernel(%arg0: i32, %arg1: memref<8x8x128xf32, #tpu.memory_space<vmem>>, %arg2: memref<8x128xf32, #tpu.memory_space<vmem>>, %arg3: memref<1x1xf32, #tpu.memory_space<smem>>, %arg4: memref<3xf32, #tpu.memory_space<smem>>) attributes {dimension_semantics = [#tpu.dimension_semantics<arbitrary>], iteration_bounds = array<i64: 1>, scalar_prefetch = 0 : i64, scratch_operands = 1 : i64, tpu.core_type = #tpu.core_type<tc>, window_params = [{transform_indices = @transform_0, window_bounds = array<i64: 8, 8, 128>}, {transform_indices = @transform_1, window_bounds = array<i64: 8, 128>}, {transform_indices = @transform_2, window_bounds = array<i64: 1, 1>}]} {
    %c0_i32 = arith.constant 0 : i32
    %0 = arith.cmpi eq, %arg0, %c0_i32 : i32
    %1 = arith.extui %0 : i1 to i32
    %c0_i32_0 = arith.constant 0 : i32
    %2 = arith.cmpi ne, %1, %c0_i32_0 : i32
    scf.if %2 {
      %cst_33 = arith.constant 0.000000e+00 : f32
      %c0_34 = arith.constant 0 : index
      %73 = memref.load %arg4[%c0_34] : memref<3xf32, #tpu.memory_space<smem>>
      memref.store %cst_33, %arg4[%c0_34] : memref<3xf32, #tpu.memory_space<smem>>
      %cst_35 = arith.constant 0.000000e+00 : f32
      %c1_36 = arith.constant 1 : index
      %74 = memref.load %arg4[%c1_36] : memref<3xf32, #tpu.memory_space<smem>>
      memref.store %cst_35, %arg4[%c1_36] : memref<3xf32, #tpu.memory_space<smem>>
      %cst_37 = arith.constant 0.000000e+00 : f32
      %c2_38 = arith.constant 2 : index
      %75 = memref.load %arg4[%c2_38] : memref<3xf32, #tpu.memory_space<smem>>
      memref.store %cst_37, %arg4[%c2_38] : memref<3xf32, #tpu.memory_space<smem>>
    } else {
    }
    %c0 = arith.constant 0 : index
    %c0_1 = arith.constant 0 : index
    %c0_2 = arith.constant 0 : index
    %3 = vector.load %arg1[%c0, %c0_1, %c0_2] : memref<8x8x128xf32, #tpu.memory_space<vmem>>, vector<1x8x128xf32>
    %4 = vector.shape_cast %3 : vector<1x8x128xf32> to vector<8x128xf32>
    %c1 = arith.constant 1 : index
    %c0_3 = arith.constant 0 : index
    %c0_4 = arith.constant 0 : index
    %5 = vector.load %arg1[%c1, %c0_3, %c0_4] : memref<8x8x128xf32, #tpu.memory_space<vmem>>, vector<1x8x128xf32>
    %6 = vector.shape_cast %5 : vector<1x8x128xf32> to vector<8x128xf32>
    %c2 = arith.constant 2 : index
    %c0_5 = arith.constant 0 : index
    %c0_6 = arith.constant 0 : index
    %7 = vector.load %arg1[%c2, %c0_5, %c0_6] : memref<8x8x128xf32, #tpu.memory_space<vmem>>, vector<1x8x128xf32>
    %8 = vector.shape_cast %7 : vector<1x8x128xf32> to vector<8x128xf32>
    %c3 = arith.constant 3 : index
    %c0_7 = arith.constant 0 : index
    %c0_8 = arith.constant 0 : index
    %9 = vector.load %arg1[%c3, %c0_7, %c0_8] : memref<8x8x128xf32, #tpu.memory_space<vmem>>, vector<1x8x128xf32>
    %10 = vector.shape_cast %9 : vector<1x8x128xf32> to vector<8x128xf32>
    %c4 = arith.constant 4 : index
    %c0_9 = arith.constant 0 : index
    %c0_10 = arith.constant 0 : index
    %11 = vector.load %arg1[%c4, %c0_9, %c0_10] : memref<8x8x128xf32, #tpu.memory_space<vmem>>, vector<1x8x128xf32>
    %12 = vector.shape_cast %11 : vector<1x8x128xf32> to vector<8x128xf32>
    %c5 = arith.constant 5 : index
    %c0_11 = arith.constant 0 : index
    %c0_12 = arith.constant 0 : index
    %13 = vector.load %arg1[%c5, %c0_11, %c0_12] : memref<8x8x128xf32, #tpu.memory_space<vmem>>, vector<1x8x128xf32>
    %14 = vector.shape_cast %13 : vector<1x8x128xf32> to vector<8x128xf32>
    %c6 = arith.constant 6 : index
    %c0_13 = arith.constant 0 : index
    %c0_14 = arith.constant 0 : index
    %15 = vector.load %arg1[%c6, %c0_13, %c0_14] : memref<8x8x128xf32, #tpu.memory_space<vmem>>, vector<1x8x128xf32>
    %16 = vector.shape_cast %15 : vector<1x8x128xf32> to vector<8x128xf32>
    %c7 = arith.constant 7 : index
    %c0_15 = arith.constant 0 : index
    %c0_16 = arith.constant 0 : index
    %17 = vector.load %arg1[%c7, %c0_15, %c0_16] : memref<8x8x128xf32, #tpu.memory_space<vmem>>, vector<1x8x128xf32>
    %18 = vector.shape_cast %17 : vector<1x8x128xf32> to vector<8x128xf32>
    %19 = arith.subf %8, %4 : vector<8x128xf32>
    %20 = arith.subf %10, %6 : vector<8x128xf32>
    %21 = arith.mulf %19, %20 : vector<8x128xf32>
    %22 = arith.subf %16, %12 : vector<8x128xf32>
    %23 = arith.subf %18, %14 : vector<8x128xf32>
    %24 = arith.mulf %22, %23 : vector<8x128xf32>
    %25 = arith.minimumf %8, %16 : vector<8x128xf32>
    %26 = arith.maximumf %4, %12 : vector<8x128xf32>
    %27 = arith.subf %25, %26 : vector<8x128xf32>
    %cst = arith.constant 0.000000e+00 : f32
    %28 = vector.broadcast %cst : f32 to vector<8x128xf32>
    %29 = arith.maximumf %27, %28 : vector<8x128xf32>
    %30 = arith.minimumf %10, %18 : vector<8x128xf32>
    %31 = arith.maximumf %6, %14 : vector<8x128xf32>
    %32 = arith.subf %30, %31 : vector<8x128xf32>
    %cst_17 = arith.constant 0.000000e+00 : f32
    %33 = vector.broadcast %cst_17 : f32 to vector<8x128xf32>
    %34 = arith.maximumf %32, %33 : vector<8x128xf32>
    %35 = arith.mulf %29, %34 : vector<8x128xf32>
    %36 = arith.addf %24, %21 : vector<8x128xf32>
    %37 = arith.subf %36, %35 : vector<8x128xf32>
    %cst_18 = arith.constant 1.000000e+00 : f32
    %38 = vector.broadcast %cst_18 : f32 to vector<8x128xf32>
    %39 = arith.addf %37, %38 : vector<8x128xf32>
    %40 = tpu.reciprocal %39 {approx = true} : vector<8x128xf32> -> vector<8x128xf32>
    %41 = arith.mulf %39, %40 : vector<8x128xf32>
    %cst_19 = arith.constant 2.000000e+00 : f32
    %42 = vector.broadcast %cst_19 : f32 to vector<8x128xf32>
    %43 = arith.subf %42, %41 : vector<8x128xf32>
    %44 = arith.mulf %40, %43 : vector<8x128xf32>
    %45 = arith.subf %37, %35 : vector<8x128xf32>
    %46 = arith.mulf %45, %44 : vector<8x128xf32>
    %c0_20 = arith.constant 0 : index
    %47 = memref.load %arg4[%c0_20] : memref<3xf32, #tpu.memory_space<smem>>
    %48 = vector.shape_cast %46 : vector<8x128xf32> to vector<1x8x128xf32>
    %cst_21 = arith.constant dense<0.000000e+00> : vector<1xf32>
    %49 = vector.multi_reduction <add>, %48, %cst_21 [1, 2] : vector<1x8x128xf32> to vector<1xf32>
    %50 = vector.shape_cast %49 : vector<1xf32> to vector<1x1x1xf32>
    %51 = vector.extract %50[0, 0, 0] : f32 from vector<1x1x1xf32>
    %52 = arith.addf %47, %51 : f32
    %c0_22 = arith.constant 0 : index
    %53 = memref.load %arg4[%c0_22] : memref<3xf32, #tpu.memory_space<smem>>
    memref.store %52, %arg4[%c0_22] : memref<3xf32, #tpu.memory_space<smem>>
    %c0_23 = arith.constant 0 : index
    %c0_24 = arith.constant 0 : index
    %54 = vector.load %arg2[%c0_23, %c0_24] : memref<8x128xf32, #tpu.memory_space<vmem>>, vector<8x128xf32>
    %c1_25 = arith.constant 1 : index
    %55 = memref.load %arg4[%c1_25] : memref<3xf32, #tpu.memory_space<smem>>
    %56 = arith.mulf %46, %54 : vector<8x128xf32>
    %57 = vector.shape_cast %56 : vector<8x128xf32> to vector<1x8x128xf32>
    %cst_26 = arith.constant dense<0.000000e+00> : vector<1xf32>
    %58 = vector.multi_reduction <add>, %57, %cst_26 [1, 2] : vector<1x8x128xf32> to vector<1xf32>
    %59 = vector.shape_cast %58 : vector<1xf32> to vector<1x1x1xf32>
    %60 = vector.extract %59[0, 0, 0] : f32 from vector<1x1x1xf32>
    %61 = arith.addf %55, %60 : f32
    %c1_27 = arith.constant 1 : index
    %62 = memref.load %arg4[%c1_27] : memref<3xf32, #tpu.memory_space<smem>>
    memref.store %61, %arg4[%c1_27] : memref<3xf32, #tpu.memory_space<smem>>
    %c2_28 = arith.constant 2 : index
    %63 = memref.load %arg4[%c2_28] : memref<3xf32, #tpu.memory_space<smem>>
    %64 = vector.shape_cast %54 : vector<8x128xf32> to vector<1x8x128xf32>
    %cst_29 = arith.constant dense<0.000000e+00> : vector<1xf32>
    %65 = vector.multi_reduction <add>, %64, %cst_29 [1, 2] : vector<1x8x128xf32> to vector<1xf32>
    %66 = vector.shape_cast %65 : vector<1xf32> to vector<1x1x1xf32>
    %67 = vector.extract %66[0, 0, 0] : f32 from vector<1x1x1xf32>
    %68 = arith.addf %63, %67 : f32
    %c2_30 = arith.constant 2 : index
    %69 = memref.load %arg4[%c2_30] : memref<3xf32, #tpu.memory_space<smem>>
    memref.store %68, %arg4[%c2_30] : memref<3xf32, #tpu.memory_space<smem>>
    %c0_i32_31 = arith.constant 0 : i32
    %70 = arith.cmpi eq, %arg0, %c0_i32_31 : i32
    %71 = arith.extui %70 : i1 to i32
    %c0_i32_32 = arith.constant 0 : i32
    %72 = arith.cmpi ne, %71, %c0_i32_32 : i32
    scf.if %72 {
      %c0_33 = arith.constant 0 : index
      %73 = memref.load %arg4[%c0_33] : memref<3xf32, #tpu.memory_space<smem>>
      %c1_34 = arith.constant 1 : index
      %74 = memref.load %arg4[%c1_34] : memref<3xf32, #tpu.memory_space<smem>>
      %c2_35 = arith.constant 2 : index
      %75 = memref.load %arg4[%c2_35] : memref<3xf32, #tpu.memory_space<smem>>
      %cst_36 = arith.constant 0.000000e+00 : f32
      %76 = arith.cmpf ogt, %75, %cst_36 : f32
      %77 = arith.select %76, %74, %73 : f32
      %cst_37 = arith.constant 0.000000e+00 : f32
      %78 = arith.cmpf ogt, %75, %cst_37 : f32
      %cst_38 = arith.constant 2.400000e+01 : f32
      %79 = arith.select %78, %75, %cst_38 : f32
      %80 = arith.divf %77, %79 : f32
      %c0_39 = arith.constant 0 : index
      %c0_40 = arith.constant 0 : index
      %81 = memref.load %arg3[%c0_39, %c0_40] : memref<1x1xf32, #tpu.memory_space<smem>>
      memref.store %80, %arg3[%c0_39, %c0_40] : memref<1x1xf32, #tpu.memory_space<smem>>
    } else {
    }
    return
  }
  func.func @transform_0(%arg0: i32) -> (i32, i32, i32) {
    %c0_i32 = arith.constant 0 : i32
    %c0_i32_0 = arith.constant 0 : i32
    %c0_i32_1 = arith.constant 0 : i32
    return %c0_i32, %arg0, %c0_i32_0 : i32, i32, i32
  }
  func.func @transform_1(%arg0: i32) -> (i32, i32) {
    %c0_i32 = arith.constant 0 : i32
    %c0_i32_0 = arith.constant 0 : i32
    return %arg0, %c0_i32 : i32, i32
  }
  func.func @transform_2(%arg0: i32) -> (i32, i32) {
    %c0_i32 = arith.constant 0 : i32
    %c0_i32_0 = arith.constant 0 : i32
    %c0_i32_1 = arith.constant 0 : i32
    return %c0_i32, %c0_i32_0 : i32, i32
  }
}

</mosaic_0001>

<llo_original>
// kernel: tpu_custom_call.1
$region0: #{tpu_custom_call.1}
  #allocation0 [shape = 'u32[]', space=smem, size = 0x4, offset = 0x4, fixed_abs, tag = 'smem constant byte address 0x4 - core index']
  #allocation1 [shape = 'u32[144,128]{1,0:T(1,128)}', space=vmem, size = 0x12000, scoped, tag = 'internal scratch']
  #allocation2 [shape = 'f32[3]{0:T(128)}', space=smem, size = 0x200, scoped, tag = 'scratch operand']
  %s0 = inlined_call_operand.hbm [shape: f32[8,8,128], index: 0, kind: input, shape index: {}]
  %s1 = inlined_call_operand.hbm [shape: f32[8,128], index: 1, kind: input, shape index: {}]
  %s2 = inlined_call_operand.hbm [shape: f32[1,1], index: 2, kind: output, shape index: {}]
  %s3 = sld [smem:[#allocation0]]
  $region34: #{tpu_custom_call.1} parent=0
    _
  %s5 = ssub.s32 1, %s3
  %s6 = scalar_select 0, %s5, %s3
  $region1: #{tpu_custom_call.1} parent=0
    #allocation3 [shape = 'u8[32768]{0}', space=vmem, size = 0x8000, scoped, tag = 'input window, operand 0, single buffered']
    #allocation4 [shape = 's32[1]{0}', space=sflag, size = 0x4, scoped, tag = 'scoped memory for tpu_custom_call.1']
    #allocation5 [shape = 's32[1]{0}', space=sflag, size = 0x4, scoped, tag = 'scoped memory for tpu_custom_call.1']
    #allocation6 [shape = 'u8[4096]{0}', space=vmem, size = 0x1000, scoped, tag = 'input window, operand 1, single buffered']
    #allocation7 [shape = 's32[1]{0}', space=sflag, size = 0x4, scoped, tag = 'scoped memory for tpu_custom_call.1']
    #allocation8 [shape = 'u8[512]{0}', space=smem, size = 0x200, scoped, tag = 'output window, operand 0, single buffered']
    %7 = vsyncpa [#allocation4], 0
    %8 = vsyncpa [#allocation7], 0
    %9 = vsyncpa [#allocation5], 0
    // Predicated region
    $region2: #{tpu_custom_call.1} parent=1 // pred_check
      _
    $region3: #{tpu_custom_call.1} parent=1 // pred_check_branch
      %11 = sbr.rel (0) target = $region5
    $region4: #{tpu_custom_call.1} parent=1 // pred_region
      %s13 = ssub.s32 1024, 1024
      %14 = vsyncadd [#allocation4], %s13
      %s15 = sshll.u32 [#allocation3], 4
      %s16 = int_to_ptr.vmem [resolvable:$true] %s15
      %21 = dma.hbm_to_vmem [thread:$0]  %s0, 1024, %s16, [#allocation4], 128, 128, 8
    $region5: #{tpu_custom_call.1} parent=1 // pred_fallthru
      _
    // Predicated region
    $region6: #{tpu_custom_call.1} parent=1 // pred_check
      _
    $region7: #{tpu_custom_call.1} parent=1 // pred_check_branch
      %23 = sbr.rel (0) target = $region9
    $region8: #{tpu_custom_call.1} parent=1 // pred_region
      %s25 = ssub.s32 128, 128
      %26 = vsyncadd [#allocation7], %s25
      %s28 = sshll.u32 [#allocation6], 4
      %s29 = int_to_ptr.vmem [resolvable:$true] %s28
      %31 = dma.hbm_to_vmem [thread:$0]  %s1, 128, %s29, [#allocation7]
    $region9: #{tpu_custom_call.1} parent=1 // pred_fallthru
      _
    // Predicated region
    $region10: #{tpu_custom_call.1} parent=1 // pred_check
      _
    $region11: #{tpu_custom_call.1} parent=1 // pred_check_branch
      %33 = sbr.rel (0) target = $region13
    $region12: #{tpu_custom_call.1} parent=1 // pred_region
      %34 = dma.done [#allocation4], 1024
    $region13: #{tpu_custom_call.1} parent=1 // pred_fallthru
      _
    // Predicated region
    $region14: #{tpu_custom_call.1} parent=1 // pred_check
      _
    $region15: #{tpu_custom_call.1} parent=1 // pred_check_branch
      %36 = sbr.rel (0) target = $region17
    $region16: #{tpu_custom_call.1} parent=1 // pred_region
      %37 = dma.done [#allocation7], 128
    $region17: #{tpu_custom_call.1} parent=1 // pred_fallthru
      _
    %p38 = scmp.eq.s32.totalorder 0, 0
    // Predicated region
    $region18: #{tpu_custom_call.1} parent=1 // pred_check
      %p39 = pneg %p38
    $region19: #{tpu_custom_call.1} parent=1 // pred_check_branch
      %41 = sbr.rel (%p39) target = $region21
    $region20: #{tpu_custom_call.1} parent=1 // pred_region
      %s42 = scalar_lea.smem [#allocation2], 0
      %43 = sst [smem:[%s42]] 0.0
      %s44 = scalar_lea.smem [#allocation2], 1
      %45 = sst [smem:[%s44]] 0.0
      %s46 = scalar_lea.smem [#allocation2], 2
      %47 = sst [smem:[%s46]] 0.0
    $region21: #{tpu_custom_call.1} parent=1 // pred_fallthru
      _
    %v48 = vld [vmem:[#allocation3] sm:$0xff]
    %s49 = scalar_lea.vmem [#allocation3], 8
    %v50 = vld [vmem:[%s49] sm:$0xff]
    %s51 = scalar_lea.vmem [#allocation3], 16
    %v52 = vld [vmem:[%s51] sm:$0xff]
    %s53 = scalar_lea.vmem [#allocation3], 24
    %v54 = vld [vmem:[%s53] sm:$0xff]
    %s55 = scalar_lea.vmem [#allocation3], 32
    %v56 = vld [vmem:[%s55] sm:$0xff]
    %s57 = scalar_lea.vmem [#allocation3], 40
    %v58 = vld [vmem:[%s57] sm:$0xff]
    %s59 = scalar_lea.vmem [#allocation3], 48
    %v60 = vld [vmem:[%s59] sm:$0xff]
    %s61 = scalar_lea.vmem [#allocation3], 56
    %v62 = vld [vmem:[%s61] sm:$0xff]
    %v63 = vsub.f32 %v52, %v48
    %v64 = vsub.f32 %v54, %v50
    %v65 = vmul.f32 %v63, %v64
    %v66 = vsub.f32 %v60, %v56
    %v67 = vsub.f32 %v62, %v58
    %v68 = vmul.f32 %v66, %v67
    %v69 = vmin.f32 %v52, %v60
    %v70 = vmax.f32 %v48, %v56
    %v71 = vsub.f32 %v69, %v70
    %v72 = vmax.f32 %v71, 0.0
    %v73 = vmin.f32 %v54, %v62
    %v74 = vmax.f32 %v50, %v58
    %v75 = vsub.f32 %v73, %v74
    %v76 = vmax.f32 %v75, 0.0
    %v77 = vmul.f32 %v72, %v76
    %v78 = vadd.f32 %v68, %v65
    %v79 = vsub.f32 %v78, %v77
    %v80 = vadd.f32 %v79, 1.0
    %v81 = vrcp.pop %v80
    %v82 = vmul.f32 %v80, %v81
    %v83 = vsub.f32 2.0, %v82
    %v84 = vmul.f32 %v81, %v83
    %v85 = vsub.f32 %v79, %v77
    %v86 = vmul.f32 %v85, %v84
    %s87 = sld [smem:[#allocation2]]
    %88 = vadd.xlane.f32.xlu0 %v86
    %v89 = vpop.xlane.xlu0 %88
    %v90 = vrot.slane %v89, 4
    %v91 = vadd.f32 %v89, %v90
    %v92 = vrot.slane %v91, 2
    %v93 = vadd.f32 %v91, %v92
    %v94 = vrot.slane %v93, 1
    %v95 = vadd.f32 %v93, %v94
    %s96 = vtos %v95
    %s97 = sadd.f32 %s87, %s96
    %s98 = scalar_lea.smem [#allocation2], 0
    %99 = sst [smem:[%s98]] %s97
    %v100 = vld [vmem:[#allocation6] sm:$0xff]
    %s101 = sld [smem:[#allocation2 + $0x1]]
    %v102 = vmul.f32 %v86, %v100
    %103 = vadd.xlane.f32.xlu0 %v102
    %v104 = vpop.xlane.xlu0 %103
    %v105 = vrot.slane %v104, 4
    %v106 = vadd.f32 %v104, %v105
    %v107 = vrot.slane %v106, 2
    %v108 = vadd.f32 %v106, %v107
    %v109 = vrot.slane %v108, 1
    %v110 = vadd.f32 %v108, %v109
    %s111 = vtos %v110
    %s112 = sadd.f32 %s101, %s111
    %s113 = scalar_lea.smem [#allocation2], 1
    %114 = sst [smem:[%s113]] %s112
    %s115 = sld [smem:[#allocation2 + $0x2]]
    %116 = vadd.xlane.f32.xlu0 %v100
    %v117 = vpop.xlane.xlu0 %116
    %v118 = vrot.slane %v117, 4
    %v119 = vadd.f32 %v117, %v118
    %v120 = vrot.slane %v119, 2
    %v121 = vadd.f32 %v119, %v120
    %v122 = vrot.slane %v121, 1
    %v123 = vadd.f32 %v121, %v122
    %s124 = vtos %v123
    %s125 = sadd.f32 %s115, %s124
    %s126 = scalar_lea.smem [#allocation2], 2
    %127 = sst [smem:[%s126]] %s125
    // Predicated region
    $region22: #{tpu_custom_call.1} parent=1 // pred_check
      %p128 = pneg %p38
    $region23: #{tpu_custom_call.1} parent=1 // pred_check_branch
      %130 = sbr.rel (%p128) target = $region25
    $region24: #{tpu_custom_call.1} parent=1 // pred_region
      %s131 = sld [smem:[#allocation2]]
      %s132 = sld [smem:[#allocation2 + $0x1]]
      %s133 = sld [smem:[#allocation2 + $0x2]]
      %p134 = scmp.gt.f32.partialorder %s133, 0.0
      %s135 = scalar_select %p134, %s132, %s131
      %s136 = scalar_select %p134, %s133, 24.0
      %v137 = vstv %s136
      %v138 = vrcp.pop %v137
      %s139 = vtos %v138
      %s140 = smul.f32 %s135, %s139
      %s141 = scalar_lea.smem [#allocation8], 0
      %142 = sst [smem:[%s141]] %s140
    $region25: #{tpu_custom_call.1} parent=1 // pred_fallthru
      _
    // Predicated region
    $region26: #{tpu_custom_call.1} parent=1 // pred_check
      _
    $region27: #{tpu_custom_call.1} parent=1 // pred_check_branch
      %144 = sbr.rel (0) target = $region29
    $region28: #{tpu_custom_call.1} parent=1 // pred_region
      %s146 = ssub.s32 16, 16
      %147 = vsyncadd [#allocation5], %s146
      %150 = dma.smem_to_hbm [#allocation8], 16, %s2, [#allocation5]
    $region29: #{tpu_custom_call.1} parent=1 // pred_fallthru
      _
    // Predicated region
    $region30: #{tpu_custom_call.1} parent=1 // pred_check
      _
    $region31: #{tpu_custom_call.1} parent=1 // pred_check_branch
      %152 = sbr.rel (0) target = $region33
    $region32: #{tpu_custom_call.1} parent=1 // pred_region
      %153 = dma.done [#allocation5], 16
    $region33: #{tpu_custom_call.1} parent=1 // pred_fallthru
      _
    %154 = sfence
    %155 = vsyncpa [#allocation4], 1
    %156 = vsyncpa [#allocation7], 1
    %157 = vsyncpa [#allocation5], 1

</llo_original>
